<compile_context>
chip_gen: v5e
topology: v5e:2x2
jax: 0.10.0
libtpu: 0.0.40
codegen_flags: <defaults>
</compile_context>

<pallas_src>
import functools

import jax
import jax.numpy as jnp
from jax.experimental import pallas as pl
from jax.experimental.pallas import tpu as pltpu


def _dino_loss_kernel(student_ref, teacher_ref, center_ref,        # inputs
                      loss_part_ref, center_part_ref,              # per-split outputs
                      loss_acc, center_acc,                        # VMEM scratch
                      *, student_temp, teacher_temp, batch_size,
                      blocks_per_split, needs_mask, center_sum_on_mxu):
    eps = 1e-5
    c = pl.program_id(0)          # split index ("parallel": one per TensorCore on v7x)
    j = pl.program_id(1)          # step within split ("arbitrary": sequential reduction)
    tb = student_ref.shape[0]     # static block rows
    d = student_ref.shape[1]      # static out_dim (never tiled -> single-pass softmax)

    # ---- init per-split accumulators ---------------------------------------
    @pl.when(j == 0)
    def _():
        loss_acc[...] = jnp.zeros_like(loss_acc)
        center_acc[...] = jnp.zeros_like(center_acc)

    # ---- native-dtype loads, f32 math in-kernel (no wrapper upcast) --------
    # No up-front ragged masks: softmax / LSE are row-wise, so garbage rows in
    # the padded tail can never contaminate valid rows; only the accumulated
    # quantities are masked below.
    s = student_ref[...].astype(jnp.float32) * jnp.float32(1.0 / student_temp)
    t = (teacher_ref[...].astype(jnp.float32) * jnp.float32(1.0 / teacher_temp)
         - center_ref[...])                                        # (tb, d)

    # ---- teacher softmax (+ epsilon, as in the reference) ------------------
    t_max = jnp.max(t, axis=-1, keepdims=True)
    t_exp = jnp.exp(t - t_max)
    t_soft = t_exp * pl.reciprocal(jnp.sum(t_exp, axis=-1, keepdims=True)) + eps

    # ---- student log-softmax pieces (full (tb,d) log-softmax never built) --
    s_max = jnp.max(s, axis=-1, keepdims=True)
    s_shift = s - s_max
    s_lse = jnp.log(jnp.sum(jnp.exp(s_shift), axis=-1, keepdims=True))  # (tb, 1)

    if needs_mask:
        # Rows at/after `batch_size` belong to the padded tail (or to a
        # clamped duplicate block of an over-long split); zero them out of
        # every accumulation.  jnp.where is NaN-safe (selects, not multiplies).
        row_start = (c * blocks_per_split + j) * tb
        valid = batch_size - row_start
        row_ids = jax.lax.broadcasted_iota(jnp.int32, (tb, 1), 0)
        row_mask = row_ids < valid                                  # (tb, 1)
        t_soft = jnp.where(row_mask, t_soft, 0.0)

    # -sum(t_soft * log_softmax(s)) = lse*sum(t_soft) - sum(t_soft*s_shift),
    # with sum(t_soft) per row == 1 + eps*d (softmax rows sum to 1).
    cross = jnp.sum(t_soft * s_shift, axis=-1, keepdims=True)       # (tb, 1)
    per_sample = s_lse * (1.0 + eps * d) - cross                    # (tb, 1)
    if needs_mask:
        per_sample = jnp.where(row_mask, per_sample, 0.0)

    loss_acc[...] += jnp.sum(per_sample, axis=0, keepdims=True)     # (1, 1)

    if center_sum_on_mxu:
        # Sub-32-bit inputs -> VALU is the binding slot; move the batch
        # reduction of t_soft onto the otherwise-idle MXU (ones-vector matmul).
        ones_row = jnp.ones((1, tb), jnp.float32)
        center_acc[...] += jnp.dot(ones_row, t_soft,
                                   preferred_element_type=jnp.float32)
    else:
        # f32 inputs are HBM-bound; keep the exact VPU sublane reduction.
        center_acc[...] += jnp.sum(t_soft, axis=0, keepdims=True)   # (1, d)

    # ---- emit per-split partial sums on the split's last step --------------
    @pl.when(j == pl.num_programs(1) - 1)
    def _():
        loss_part_ref[0] = loss_acc[...]
        center_part_ref[0] = center_acc[...]


def _default_vmem_budget_bytes():
    """Per-generation working-set budget: stays inside the scoped-VMEM defaults
    (16 MiB v5e, 32 MiB v6e/v7x) and well under v7x's 64 MiB physical VMEM."""
    try:
        cap = getattr(pltpu.get_tpu_info(), "vmem_capacity_bytes", None)
    except Exception:                      # conservative fallback off-TPU etc.
        cap = None
    if not cap:
        return 10 * 1024 * 1024
    return int(min(24 * 1024 * 1024, cap // 4))


def dino_loss(student_output, teacher_output, center,
              teacher_temp=0.04, student_temp=0.1, center_momentum=0.9,
              block_rows=None, n_splits=2, vmem_budget_bytes=None,
              vmem_limit_bytes=None, center_colsum_on_mxu=None):
    """Returns (loss scalar, updated center (1, out_dim)).

    Inputs are consumed in their native dtype (e.g. bf16); all math is f32.
    """
    # TODO(synk): the list-input and teacher/student batch-size mismatch
    # (repeat_interleave) paths of the reference are not handled; both inputs
    # must share the same (B, D) shape.
    assert student_output.shape == teacher_output.shape
    B, D = student_output.shape
    assert center.shape == (1, D)

    s_item = student_output.dtype.itemsize
    t_item = teacher_output.dtype.itemsize
    if vmem_budget_bytes is None:
        vmem_budget_bytes = _default_vmem_budget_bytes()

    # ---- tile sizing: double-buffered native inputs + ~6 live f32 temps ----
    if block_rows is None:
        bytes_per_row = D * (2 * (s_item + t_item) + 6 * 4)
        tb = int(vmem_budget_bytes // max(bytes_per_row, 1))
    else:
        tb = int(block_rows)
    if tb >= B:
        tb = B                                   # single full-extent block
    else:
        tb = max(8, (tb // 8) * 8)               # (8,128) sublane constraint

    nat_blocks = pl.cdiv(B, tb)                  # blocks actually backed by data
    ns = max(1, min(int(n_splits), nat_blocks))  # parallel splits (cores on v7x)
    spc = pl.cdiv(nat_blocks, ns)                # inner ("arbitrary") steps / split
    total_blocks = ns * spc
    needs_mask = (total_blocks * tb) != B
    needs_clamp = total_blocks > nat_blocks

    if needs_clamp:
        # Logically-OOB steps of the last split re-read the last real block
        # (keeping the DMA in bounds); their rows are fully masked out.
        def in_map(c, j):
            return (jnp.minimum(c * spc + j, nat_blocks - 1), 0)
    else:
        def in_map(c, j):
            return (c * spc + j, 0)

    if center_colsum_on_mxu is None:
        center_colsum_on_mxu = (s_item < 4) or (t_item < 4)

    if vmem_limit_bytes is None:
        # Explicit headroom above the working set so the scoped-VMEM default
        # never collapses double-buffering (v5e default is only 16 MiB).
        vmem_limit_bytes = int(vmem_budget_bytes + 8 * 1024 * 1024)

    kernel = functools.partial(
        _dino_loss_kernel,
        student_temp=float(student_temp),
        teacher_temp=float(teacher_temp),
        batch_size=B,
        blocks_per_split=int(spc),
        needs_mask=bool(needs_mask),
        center_sum_on_mxu=bool(center_colsum_on_mxu),
    )

    loss_parts, center_parts = pl.pallas_call(
        kernel,
        out_shape=(
            jax.ShapeDtypeStruct((ns, 1, 1), jnp.float32),
            jax.ShapeDtypeStruct((ns, 1, D), jnp.float32),
        ),
        grid_spec=pltpu.PrefetchScalarGridSpec(
            num_scalar_prefetch=0,
            grid=(ns, spc),
            in_specs=[
                pl.BlockSpec((tb, D), in_map),                   # student tile
                pl.BlockSpec((tb, D), in_map),                   # teacher tile
                pl.BlockSpec((1, D), lambda c, j: (0, 0)),       # center (resident)
            ],
            out_specs=[
                pl.BlockSpec((1, 1, 1), lambda c, j: (c, 0, 0)),  # per-split loss sum
                pl.BlockSpec((1, 1, D), lambda c, j: (c, 0, 0)),  # per-split t_soft col-sum
            ],
            scratch_shapes=[
                pltpu.VMEM((1, 1), jnp.float32),
                pltpu.VMEM((1, D), jnp.float32),
            ],
        ),
        compiler_params=pltpu.CompilerParams(
            dimension_semantics=("parallel", "arbitrary"),
            vmem_limit_bytes=vmem_limit_bytes,
        ),
    )(student_output, teacher_output, center.astype(jnp.float32))

    # ---- trivial cross-split combine + finalize (mean, floor, center EMA) --
    inv_b = jnp.float32(1.0 / B)
    loss = jnp.sum(loss_parts) * inv_b
    loss = jnp.where(loss < 1e-8, jnp.float32(0.1), loss)        # reference floor
    mean_t_soft = jnp.sum(center_parts, axis=0) * inv_b           # (1, D)
    new_center = (center.astype(jnp.float32) * jnp.float32(center_momentum)
                  + mean_t_soft * jnp.float32(1.0 - center_momentum))
    return loss, new_center


if __name__ == "__main__":
    def ref_fn(s_in, t_in, c, st=0.1, tt=0.04, cm=0.9):
        s = s_in.astype(jnp.float32) / st
        t = t_in.astype(jnp.float32) / tt - c
        t_soft = jax.nn.softmax(t, axis=-1) + 1e-5
        s_log = jax.nn.log_softmax(s, axis=-1)
        l = -jnp.sum(t_soft * s_log, axis=-1).mean()
        l = jnp.where(l < 1e-8, 0.1, l)
        nc = c * cm + t_soft.mean(axis=0, keepdims=True) * (1 - cm)
        return l, nc

    OUT_DIM = 256
    key = jax.random.PRNGKey(0)
    k1, k2, k3, k4 = jax.random.split(key, 4)
    # register_buffer('center', torch.zeros(1, out_dim)) -> deterministic zeros.
    center = jnp.zeros((1, OUT_DIM), dtype=jnp.float32)

    # Case 1: f32, evenly tiled -> exercises the 2-way core split, no masking,
    # exact VPU column sum.
    B1 = 64
    s1 = jax.random.normal(k1, (B1, OUT_DIM), dtype=jnp.float32)
    t1 = jax.random.normal(k2, (B1, OUT_DIM), dtype=jnp.float32)
    loss1, nc1 = dino_loss(s1, t1, center, block_rows=16)
    jax.block_until_ready((loss1, nc1))
    rl1, rc1 = ref_fn(s1, t1, center)
    assert jnp.allclose(loss1, rl1, rtol=1e-4, atol=1e-5), (loss1, rl1)
    assert jnp.allclose(nc1, rc1, rtol=1e-4, atol=1e-6), (nc1, rc1)

    # Case 2: bf16, ragged batch -> exercises the clamped index map, tail
    # masking and the MXU column-sum path (native-dtype HBM loads).
    B2 = 40
    s2 = jax.random.normal(k3, (B2, OUT_DIM), dtype=jnp.float32)
    t2 = jax.random.normal(k4, (B2, OUT_DIM), dtype=jnp.float32)
    s2b, t2b = s2.astype(jnp.bfloat16), t2.astype(jnp.bfloat16)
    loss2, nc2 = dino_loss(s2b, t2b, center, block_rows=16)
    jax.block_until_ready((loss2, nc2))
    rl2, rc2 = ref_fn(s2b, t2b, center)
    assert jnp.allclose(loss2, rl2, rtol=1e-3, atol=1e-4), (loss2, rl2)
    # Center tolerance allows for the MXU's reduced-precision f32 matmul path.
    assert jnp.allclose(nc2, rc2, rtol=1e-2, atol=2e-5), (nc2, rc2)

    # Case 3: auto tile sizing (no block_rows) -> single full-extent block.
    loss3, nc3 = dino_loss(s1, t1, center)
    jax.block_until_ready((loss3, nc3))
    assert jnp.allclose(loss3, rl1, rtol=1e-4, atol=1e-5), (loss3, rl1)
    assert jnp.allclose(nc3, rc1, rtol=1e-4, atol=1e-6)

    print("KERNEL_OK")
</pallas_src>

<mosaic_0001>
module attributes {stable_mosaic.version = 11 : i64} {
  func.func @_dino_loss_kernel(%arg0: i32, %arg1: i32, %arg2: memref<16x256xf32, #tpu.memory_space<vmem>>, %arg3: memref<16x256xf32, #tpu.memory_space<vmem>>, %arg4: memref<1x256xf32, #tpu.memory_space<vmem>>, %arg5: memref<1x1x1xf32, #tpu.memory_space<vmem>>, %arg6: memref<1x1x256xf32, #tpu.memory_space<vmem>>, %arg7: memref<1x1xf32, #tpu.memory_space<vmem>>, %arg8: memref<1x256xf32, #tpu.memory_space<vmem>>) attributes {dimension_semantics = [#tpu.dimension_semantics<parallel>, #tpu.dimension_semantics<arbitrary>], iteration_bounds = array<i64: 2, 2>, scalar_prefetch = 0 : i64, scratch_operands = 2 : i64, tpu.core_type = #tpu.core_type<tc>, window_params = [{transform_indices = @transform_0, window_bounds = array<i64: 16, 256>}, {transform_indices = @transform_1, window_bounds = array<i64: 16, 256>}, {pipeline_mode = #tpu.pipeline_mode<synchronous>, transform_indices = @transform_2, window_bounds = array<i64: 1, 256>}, {transform_indices = @transform_3, window_bounds = array<i64: 1, 1, 1>}, {transform_indices = @transform_4, window_bounds = array<i64: 1, 1, 256>}]} {
    %c0_i32 = arith.constant 0 : i32
    %0 = arith.cmpi eq, %arg1, %c0_i32 : i32
    %1 = arith.extui %0 : i1 to i32
    %c0_i32_0 = arith.constant 0 : i32
    %2 = arith.cmpi ne, %1, %c0_i32_0 : i32
    scf.if %2 {
      %cst_25 = arith.constant 0.000000e+00 : f32
      %51 = vector.broadcast %cst_25 : f32 to vector<1x1xf32>
      %c0_26 = arith.constant 0 : index
      %c0_27 = arith.constant 0 : index
      %52 = vector.load %arg7[%c0_26, %c0_27] : memref<1x1xf32, #tpu.memory_space<vmem>>, vector<1x1xf32>
      tpu.vector_store %arg7[%c0_26, %c0_27], %51 {strides = array<i32>} : memref<1x1xf32, #tpu.memory_space<vmem>>, vector<1x1xf32>,
      %cst_28 = arith.constant 0.000000e+00 : f32
      %53 = vector.broadcast %cst_28 : f32 to vector<1x256xf32>
      %c0_29 = arith.constant 0 : index
      %c0_30 = arith.constant 0 : index
      %54 = vector.load %arg8[%c0_29, %c0_30] : memref<1x256xf32, #tpu.memory_space<vmem>>, vector<1x256xf32>
      tpu.vector_store %arg8[%c0_29, %c0_30], %53 {strides = array<i32>} : memref<1x256xf32, #tpu.memory_space<vmem>>, vector<1x256xf32>,
    } else {
    }
    %c0 = arith.constant 0 : index
    %c0_1 = arith.constant 0 : index
    %3 = vector.load %arg2[%c0, %c0_1] : memref<16x256xf32, #tpu.memory_space<vmem>>, vector<16x256xf32>
    %cst = arith.constant 1.000000e+01 : f32
    %4 = vector.broadcast %cst : f32 to vector<16x256xf32>
    %5 = arith.mulf %3, %4 : vector<16x256xf32>
    %c0_2 = arith.constant 0 : index
    %c0_3 = arith.constant 0 : index
    %6 = vector.load %arg3[%c0_2, %c0_3] : memref<16x256xf32, #tpu.memory_space<vmem>>, vector<16x256xf32>
    %cst_4 = arith.constant 2.500000e+01 : f32
    %7 = vector.broadcast %cst_4 : f32 to vector<16x256xf32>
    %8 = arith.mulf %6, %7 : vector<16x256xf32>
    %c0_5 = arith.constant 0 : index
    %c0_6 = arith.constant 0 : index
    %9 = vector.load %arg4[%c0_5, %c0_6] : memref<1x256xf32, #tpu.memory_space<vmem>>, vector<1x256xf32>
    %10 = vector.broadcast %9 : vector<1x256xf32> to vector<16x256xf32>
    %11 = arith.subf %8, %10 : vector<16x256xf32>
    %cst_7 = arith.constant dense<0xFF800000> : vector<16xf32>
    %12 = vector.multi_reduction <maximumf>, %11, %cst_7 [1] : vector<16x256xf32> to vector<16xf32>
    %13 = vector.shape_cast %12 : vector<16xf32> to vector<16x1xf32>
    %14 = vector.broadcast %13 : vector<16x1xf32> to vector<16x256xf32>
    %15 = arith.subf %11, %14 : vector<16x256xf32>
    %16 = math.exp %15 : vector<16x256xf32>
    %cst_8 = arith.constant dense<0.000000e+00> : vector<16xf32>
    %17 = vector.multi_reduction <add>, %16, %cst_8 [1] : vector<16x256xf32> to vector<16xf32>
    %18 = vector.shape_cast %17 : vector<16xf32> to vector<16x1xf32>
    %19 = tpu.reciprocal %18 : vector<16x1xf32> -> vector<16x1xf32>
    %20 = vector.broadcast %19 : vector<16x1xf32> to vector<16x256xf32>
    %21 = arith.mulf %16, %20 : vector<16x256xf32>
    %cst_9 = arith.constant 9.99999974E-6 : f32
    %22 = vector.broadcast %cst_9 : f32 to vector<16x256xf32>
    %23 = arith.addf %21, %22 : vector<16x256xf32>
    %cst_10 = arith.constant dense<0xFF800000> : vector<16xf32>
    %24 = vector.multi_reduction <maximumf>, %5, %cst_10 [1] : vector<16x256xf32> to vector<16xf32>
    %25 = vector.shape_cast %24 : vector<16xf32> to vector<16x1xf32>
    %26 = vector.broadcast %25 : vector<16x1xf32> to vector<16x256xf32>
    %27 = arith.subf %5, %26 : vector<16x256xf32>
    %28 = math.exp %27 : vector<16x256xf32>
    %cst_11 = arith.constant dense<0.000000e+00> : vector<16xf32>
    %29 = vector.multi_reduction <add>, %28, %cst_11 [1] : vector<16x256xf32> to vector<16xf32>
    %30 = vector.shape_cast %29 : vector<16xf32> to vector<16x1xf32>
    %31 = math.log %30 : vector<16x1xf32>
    %32 = arith.mulf %23, %27 : vector<16x256xf32>
    %cst_12 = arith.constant dense<0.000000e+00> : vector<16xf32>
    %33 = vector.multi_reduction <add>, %32, %cst_12 [1] : vector<16x256xf32> to vector<16xf32>
    %34 = vector.shape_cast %33 : vector<16xf32> to vector<16x1xf32>
    %cst_13 = arith.constant 1.002560e+00 : f32
    %35 = vector.broadcast %cst_13 : f32 to vector<16x1xf32>
    %36 = arith.mulf %31, %35 : vector<16x1xf32>
    %37 = arith.subf %36, %34 : vector<16x1xf32>
    %c0_14 = arith.constant 0 : index
    %c0_15 = arith.constant 0 : index
    %38 = vector.load %arg7[%c0_14, %c0_15] : memref<1x1xf32, #tpu.memory_space<vmem>>, vector<1x1xf32>
    %cst_16 = arith.constant dense<0.000000e+00> : vector<1xf32>
    %39 = vector.multi_reduction <add>, %37, %cst_16 [0] : vector<16x1xf32> to vector<1xf32>
    %40 = vector.shape_cast %39 : vector<1xf32> to vector<1x1xf32>
    %41 = arith.addf %38, %40 : vector<1x1xf32>
    %c0_17 = arith.constant 0 : index
    %c0_18 = arith.constant 0 : index
    %42 = vector.load %arg7[%c0_17, %c0_18] : memref<1x1xf32, #tpu.memory_space<vmem>>, vector<1x1xf32>
    tpu.vector_store %arg7[%c0_17, %c0_18], %41 {strides = array<i32>} : memref<1x1xf32, #tpu.memory_space<vmem>>, vector<1x1xf32>,
    %c0_19 = arith.constant 0 : index
    %c0_20 = arith.constant 0 : index
    %43 = vector.load %arg8[%c0_19, %c0_20] : memref<1x256xf32, #tpu.memory_space<vmem>>, vector<1x256xf32>
    %cst_21 = arith.constant dense<0.000000e+00> : vector<256xf32>
    %44 = vector.multi_reduction <add>, %23, %cst_21 [0] : vector<16x256xf32> to vector<256xf32>
    %45 = vector.shape_cast %44 : vector<256xf32> to vector<1x256xf32>
    %46 = arith.addf %43, %45 : vector<1x256xf32>
    %c0_22 = arith.constant 0 : index
    %c0_23 = arith.constant 0 : index
    %47 = vector.load %arg8[%c0_22, %c0_23] : memref<1x256xf32, #tpu.memory_space<vmem>>, vector<1x256xf32>
    tpu.vector_store %arg8[%c0_22, %c0_23], %46 {strides = array<i32>} : memref<1x256xf32, #tpu.memory_space<vmem>>, vector<1x256xf32>,
    %c1_i32 = arith.constant 1 : i32
    %48 = arith.cmpi eq, %arg1, %c1_i32 : i32
    %49 = arith.extui %48 : i1 to i32
    %c0_i32_24 = arith.constant 0 : i32
    %50 = arith.cmpi ne, %49, %c0_i32_24 : i32
    scf.if %50 {
      %c0_25 = arith.constant 0 : index
      %c0_26 = arith.constant 0 : index
      %51 = vector.load %arg7[%c0_25, %c0_26] : memref<1x1xf32, #tpu.memory_space<vmem>>, vector<1x1xf32>
      %c0_27 = arith.constant 0 : index
      %c0_28 = arith.constant 0 : index
      %c0_29 = arith.constant 0 : index
      %52 = vector.load %arg5[%c0_27, %c0_28, %c0_29] : memref<1x1x1xf32, #tpu.memory_space<vmem>>, vector<1x1x1xf32>
      %53 = vector.shape_cast %52 : vector<1x1x1xf32> to vector<1x1xf32>
      %54 = vector.shape_cast %51 : vector<1x1xf32> to vector<1x1x1xf32>
      tpu.vector_store %arg5[%c0_27, %c0_28, %c0_29], %54 {strides = array<i32>} : memref<1x1x1xf32, #tpu.memory_space<vmem>>, vector<1x1x1xf32>,
      %c0_30 = arith.constant 0 : index
      %c0_31 = arith.constant 0 : index
      %55 = vector.load %arg8[%c0_30, %c0_31] : memref<1x256xf32, #tpu.memory_space<vmem>>, vector<1x256xf32>
      %c0_32 = arith.constant 0 : index
      %c0_33 = arith.constant 0 : index
      %c0_34 = arith.constant 0 : index
      %56 = vector.load %arg6[%c0_32, %c0_33, %c0_34] : memref<1x1x256xf32, #tpu.memory_space<vmem>>, vector<1x1x256xf32>
      %57 = vector.shape_cast %56 : vector<1x1x256xf32> to vector<1x256xf32>
      %58 = vector.shape_cast %55 : vector<1x256xf32> to vector<1x1x256xf32>
      tpu.vector_store %arg6[%c0_32, %c0_33, %c0_34], %58 {strides = array<i32>} : memref<1x1x256xf32, #tpu.memory_space<vmem>>, vector<1x1x256xf32>,
    } else {
    }
    return
  }
  func.func @transform_0(%arg0: i32, %arg1: i32) -> (i32, i32) {
    %c2_i32 = arith.constant 2 : i32
    %0 = arith.muli %arg0, %c2_i32 : i32
    %1 = arith.addi %0, %arg1 : i32
    %c0_i32 = arith.constant 0 : i32
    %c0_i32_0 = arith.constant 0 : i32
    return %1, %c0_i32 : i32, i32
  }
  func.func @transform_1(%arg0: i32, %arg1: i32) -> (i32, i32) {
    %c2_i32 = arith.constant 2 : i32
    %0 = arith.muli %arg0, %c2_i32 : i32
    %1 = arith.addi %0, %arg1 : i32
    %c0_i32 = arith.constant 0 : i32
    %c0_i32_0 = arith.constant 0 : i32
    return %1, %c0_i32 : i32, i32
  }
  func.func @transform_2(%arg0: i32, %arg1: i32) -> (i32, i32) {
    %c0_i32 = arith.constant 0 : i32
    %c0_i32_0 = arith.constant 0 : i32
    %c0_i32_1 = arith.constant 0 : i32
    return %c0_i32, %c0_i32_0 : i32, i32
  }
  func.func @transform_3(%arg0: i32, %arg1: i32) -> (i32, i32, i32) {
    %c0_i32 = arith.constant 0 : i32
    %c0_i32_0 = arith.constant 0 : i32
    %c0_i32_1 = arith.constant 0 : i32
    return %arg0, %c0_i32, %c0_i32_0 : i32, i32, i32
  }
  func.func @transform_4(%arg0: i32, %arg1: i32) -> (i32, i32, i32) {
    %c0_i32 = arith.constant 0 : i32
    %c0_i32_0 = arith.constant 0 : i32
    %c0_i32_1 = arith.constant 0 : i32
    return %arg0, %c0_i32, %c0_i32_0 : i32, i32, i32
  }
}

</mosaic_0001>

<llo_original>
// kernel: tpu_custom_call.1
$region0: #{tpu_custom_call.1}
  #allocation0 [shape = 'u32[]', space=smem, size = 0x4, offset = 0x4, fixed_abs, tag = 'smem constant byte address 0x4 - core index']
  #allocation1 [shape = 'u32[72,128]{1,0:T(1,128)}', space=vmem, size = 0x9000, scoped, tag = 'internal scratch']
  #allocation2 [shape = 'f32[1,1]{1,0:T(1,128)}', space=vmem, size = 0x200, scoped, tag = 'scratch operand']
  #allocation3 [shape = 'f32[1,256]{1,0:T(1,128)}', space=vmem, size = 0x400, scoped, tag = 'scratch operand']
  %s0 = inlined_call_operand.hbm [shape: f32[64,256], index: 0, kind: input, shape index: {}]
  %s1 = inlined_call_operand.hbm [shape: f32[64,256], index: 1, kind: input, shape index: {}]
  %s2 = inlined_call_operand.hbm [shape: f32[1,256], index: 2, kind: input, shape index: {}]
  %s3 = inlined_call_operand.vmem [shape: f32[2,1,1], index: 3, kind: output, shape index: {0}]
  %s4 = inlined_call_operand.hbm [shape: f32[2,1,256], index: 4, kind: output, shape index: {1}]
  %5 = xla_tuple %s3, %s4
  %s6 = sld [smem:[#allocation0]]
  $region73: #{tpu_custom_call.1} parent=0
    _
  %s8 = ssub.s32 1, %s6
  %s9 = scalar_select 0, %s8, %s6
  $region1: #{tpu_custom_call.1} parent=0
    #allocation4 [shape = 'u8[32768]{0}', space=vmem, size = 0x8000, scoped, tag = 'input window, operand 0']
    #allocation5 [shape = 's32[2]{0}', space=sflag, size = 0x8, scoped, tag = 'scoped memory for tpu_custom_call.1']
    #allocation6 [shape = 's32[2]{0}', space=sflag, size = 0x8, scoped, tag = 'scoped memory for tpu_custom_call.1']
    #allocation7 [shape = 'u8[32768]{0}', space=vmem, size = 0x8000, scoped, tag = 'input window, operand 1']
    #allocation8 [shape = 's32[2]{0}', space=sflag, size = 0x8, scoped, tag = 'scoped memory for tpu_custom_call.1']
    #allocation9 [shape = 'u8[1024]{0}', space=vmem, size = 0x400, scoped, tag = 'input window, operand 2, single buffered']
    #allocation10 [shape = 'u8[2048]{0}', space=vmem, size = 0x800, scoped, tag = 'output window, operand 1']
    %10 = vsyncpa [#allocation5], 0
    %s11 = scalar_lea.sflag [#allocation5], 1
    %12 = vsyncpa %s11, 0
    %13 = vsyncpa [#allocation8], 0
    %s14 = scalar_lea.sflag [#allocation8], 1
    %15 = vsyncpa %s14, 0
    %16 = vsyncpa [#allocation6], 0
    %s17 = scalar_lea.sflag [#allocation6], 1
    %18 = vsyncpa %s17, 0
    loop: start=0, step=1, limit=6
    $region2: #{tpu_custom_call.1} parent=1 // loop_pre_header
      _
    $region3: #{tpu_custom_call.1} parent=1 // loop_header
      %s20 = sphi 0, %s24
      %p21 = scmp.ge.s32.totalorder %s20, 6
      %s27 = sphi 0, %s39
      %s28 = sphi 0, %s35
      %s29 = sphi 0, %s27
      %s30 = sphi 0, %s28
      %s31 = sphi 0, %s29
      %s32 = sphi 0, %s30
      %s46 = sphi 0, %s48
      %s49 = sphi 0, %s46
      %s50 = sphi 0, %s49
      %s66 = sphi 0, %s50
      %s76 = sphi 0, %s78
      %s79 = sphi 0, %s76
      %s80 = sphi 0, %s79
      %s96 = sphi 0, %s80
      %s100 = sphi 0, %s100
      %s102 = sphi 0, %s100
      %s103 = sphi 0, %s102
      %s117 = sphi 0, %s103
      %s123 = sphi 0, %s125
      %s126 = sphi 0, %s123
      %s127 = sphi 0, %s126
      %s143 = sphi 0, %s127
      %s149 = sphi 0, %s151
      %s152 = sphi 0, %s149
      %s153 = sphi 0, %s152
      %s169 = sphi 0, %s153
    $region4: #{tpu_custom_call.1} parent=1 // loop_header_branch
      %23 = sbr.rel (%p21) target = $region8
    $region5: #{tpu_custom_call.1} parent=1 // loop_body
      %s25 = ssub.s32 %s20, 1
      %s26 = ssub.s32 %s20, 2
      %s33 = sadd.s32 1, %s28
      %p34 = scmp.ge.s32.totalorder %s33, 2
      %s35 = scalar_select %p34, 0, %s33
      %s36 = sadd.s32 1, %s27
      %s37 = scalar_select %p34, %s36, %s27
      %p38 = scmp.ge.s32.totalorder %s37, 2
      %s39 = scalar_select %p38, 0, %s37
      %s40 = smul.u32 %s27, 2
      %s41 = sadd.s32 %s40, %s28
      %s42 = smul.u32 %s39, 2
      %s43 = sadd.s32 %s42, %s35
      %s44 = ssub.s32 %s41, %s43
      %p45 = scmp.eq.s32.totalorder %s44, 0
      %s47 = sadd.s32 %s46, 1
      %s48 = scalar_select %p45, %s46, %s47
      %p51 = pneg %p45
      %p52 = scmp.eq.s32.totalorder %s20, 3
      %p53 = por %p51, %p52
      %p54 = scmp.ne.s32.totalorder %s46, %s49
      %p55 = scmp.eq.s32.totalorder %s20, 0
      %p56 = por %p54, %p55
      %p57 = scmp.ne.s32.totalorder %s46, %s49
      %p58 = scmp.eq.s32.totalorder %s25, 3
      %p59 = por %p57, %p58
      %p60 = scmp.ne.s32.totalorder %s49, %s50
      %p61 = scmp.eq.s32.totalorder %s25, 0
      %p62 = por %p60, %p61
      %p63 = scmp.ne.s32.totalorder %s49, %s50
      %p64 = scmp.eq.s32.totalorder %s26, 3
      %p65 = por %p63, %p64
      %p67 = scmp.ne.s32.totalorder %s50, %s66
      %p68 = scmp.eq.s32.totalorder %s26, 0
      %p69 = por %p67, %p68
      %s70 = smul.u32 %s27, 2
      %s71 = sadd.s32 %s70, %s28
      %s72 = smul.u32 %s39, 2
      %s73 = sadd.s32 %s72, %s35
      %s74 = ssub.s32 %s71, %s73
      %p75 = scmp.eq.s32.totalorder %s74, 0
      %s77 = sadd.s32 %s76, 1
      %s78 = scalar_select %p75, %s76, %s77
      %p81 = pneg %p75
      %p82 = scmp.eq.s32.totalorder %s20, 3
      %p83 = por %p81, %p82
      %p84 = scmp.ne.s32.totalorder %s76, %s79
      %p85 = scmp.eq.s32.totalorder %s20, 0
      %p86 = por %p84, %p85
      %p87 = scmp.ne.s32.totalorder %s76, %s79
      %p88 = scmp.eq.s32.totalorder %s25, 3
      %p89 = por %p87, %p88
      %p90 = scmp.ne.s32.totalorder %s79, %s80
      %p91 = scmp.eq.s32.totalorder %s25, 0
      %p92 = por %p90, %p91
      %p93 = scmp.ne.s32.totalorder %s79, %s80
      %p94 = scmp.eq.s32.totalorder %s26, 3
      %p95 = por %p93, %p94
      %p97 = scmp.ne.s32.totalorder %s80, %s96
      %p98 = scmp.eq.s32.totalorder %s26, 0
      %p99 = por %p97, %p98
      %s101 = sadd.s32 %s100, 1
      %p104 = scmp.eq.s32.totalorder %s20, 3
      %p105 = scmp.ne.s32.totalorder %s100, %s102
      %p106 = scmp.eq.s32.totalorder %s20, 0
      %p107 = por %p105, %p106
      %p108 = scmp.ne.s32.totalorder %s100, %s102
      %p109 = scmp.eq.s32.totalorder %s25, 3
      %p110 = por %p108, %p109
      %p111 = scmp.ne.s32.totalorder %s102, %s103
      %p112 = scmp.eq.s32.totalorder %s25, 0
      %p113 = por %p111, %p112
      %p114 = scmp.ne.s32.totalorder %s102, %s103
      %p115 = scmp.eq.s32.totalorder %s26, 3
      %p116 = por %p114, %p115
      %p118 = scmp.ne.s32.totalorder %s103, %s117
      %p119 = scmp.eq.s32.totalorder %s26, 0
      %p120 = por %p118, %p119
      %s121 = ssub.s32 %s27, %s39
      %p122 = scmp.eq.s32.totalorder %s121, 0
      %s124 = sadd.s32 %s123, 1
      %s125 = scalar_select %p122, %s123, %s124
      %p128 = pneg %p122
      %p129 = scmp.eq.s32.totalorder %s20, 3
      %p130 = por %p128, %p129
      %p131 = scmp.ne.s32.totalorder %s123, %s126
      %p132 = scmp.eq.s32.totalorder %s20, 0
      %p133 = por %p131, %p132
      %p134 = scmp.ne.s32.totalorder %s123, %s126
      %p135 = scmp.eq.s32.totalorder %s25, 3
      %p136 = por %p134, %p135
      %p137 = scmp.ne.s32.totalorder %s126, %s127
      %p138 = scmp.eq.s32.totalorder %s25, 0
      %p139 = por %p137, %p138
      %p140 = scmp.ne.s32.totalorder %s126, %s127
      %p141 = scmp.eq.s32.totalorder %s26, 3
      %p142 = por %p140, %p141
      %p144 = scmp.ne.s32.totalorder %s127, %s143
      %p145 = scmp.eq.s32.totalorder %s26, 0
      %p146 = por %p144, %p145
      %s147 = ssub.s32 %s27, %s39
      %p148 = scmp.eq.s32.totalorder %s147, 0
      %s150 = sadd.s32 %s149, 1
      %s151 = scalar_select %p148, %s149, %s150
      %p154 = pneg %p148
      %p155 = scmp.eq.s32.totalorder %s20, 3
      %p156 = por %p154, %p155
      %p157 = scmp.ne.s32.totalorder %s149, %s152
      %p158 = scmp.eq.s32.totalorder %s20, 0
      %p159 = por %p157, %p158
      %p160 = scmp.ne.s32.totalorder %s149, %s152
      %p161 = scmp.eq.s32.totalorder %s25, 3
      %p162 = por %p160, %p161
      %p163 = scmp.ne.s32.totalorder %s152, %s153
      %p164 = scmp.eq.s32.totalorder %s25, 0
      %p165 = por %p163, %p164
      %p166 = scmp.ne.s32.totalorder %s152, %s153
      %p167 = scmp.eq.s32.totalorder %s26, 3
      %p168 = por %p166, %p167
      %p170 = scmp.ne.s32.totalorder %s153, %s169
      %p171 = scmp.eq.s32.totalorder %s26, 0
      %p172 = por %p170, %p171
      %p173 = scmp.le.s32.totalorder 1, %s20
      %p174 = scmp.lt.s32.totalorder %s20, 5
      %p175 = pnand %p173, %p174
      %p176 = pneg %p175
      // Predicated region
      $region9: #{tpu_custom_call.1} parent=5 // pred_check
        _
      $region10: #{tpu_custom_call.1} parent=5 // pred_check_branch
        %178 = sbr.rel (%p175) target = $region12
      $region11: #{tpu_custom_call.1} parent=5 // pred_region
        %s179 = ssub.s32 %s20, 1
        // Predicated region
        $region13: #{tpu_custom_call.1} parent=11 // pred_check
          %p180 = pneg %p113
        $region14: #{tpu_custom_call.1} parent=11 // pred_check_branch
          %182 = sbr.rel (%p180) target = $region16
        $region15: #{tpu_custom_call.1} parent=11 // pred_region
          %184 = vsyncadd [#allocation8], 0
          %s186 = sshll.u32 %s2, 4
          %s187 = int_to_ptr.hbm [resolvable:$true] %s186
          %s188 = sshll.u32 [#allocation9], 4
          %s189 = int_to_ptr.vmem [resolvable:$true] %s188
          %191 = dma.hbm_to_vmem [thread:$0]  %s187, 32, %s189, [#allocation8]
        $region16: #{tpu_custom_call.1} parent=11 // pred_fallthru
          _
      $region12: #{tpu_custom_call.1} parent=5 // pred_fallthru
        _
      %p192 = scmp.lt.s32.totalorder %s20, 4
      // Predicated region
      $region17: #{tpu_custom_call.1} parent=5 // pred_check
        %p193 = pneg %p192
      $region18: #{tpu_custom_call.1} parent=5 // pred_check_branch
        %195 = sbr.rel (%p193) target = $region20
      $region19: #{tpu_custom_call.1} parent=5 // pred_region
        // Predicated region
        $region21: #{tpu_custom_call.1} parent=19 // pred_check
          %p196 = pneg %p56
        $region22: #{tpu_custom_call.1} parent=19 // pred_check_branch
          %198 = sbr.rel (%p196) target = $region24
        $region23: #{tpu_custom_call.1} parent=19 // pred_region
          %s199 = sand.u32 %s46, 1
          %s200 = scalar_lea.sflag [#allocation5], %s199
          %s201 = sand.u32 %s46, 1
          %s202 = smul.addr %s201, 32
          %s203 = scalar_lea.vmem [#allocation4], %s202
          %s204 = smul.u32 %s27, 2
          %s205 = sadd.s32 %s204, %s28
          %s206 = smul.u32 2, %s205
          %208 = vsyncadd %s200, 0
          %s209 = smul.addr %s206, 2
          %s210 = smul.addr %s209, 8
          %s211 = scalar_lea.hbm %s0, %s210
          %s212 = sshll.u32 %s211, 4
          %s213 = int_to_ptr.hbm [resolvable:$true] %s212
          %s214 = sshll.u32 %s203, 4
          %s215 = int_to_ptr.vmem [resolvable:$true] %s214
          %220 = dma.hbm_to_vmem [thread:$0]  %s213, 512, %s215, %s200, 256, 256, 16
        $region24: #{tpu_custom_call.1} parent=19 // pred_fallthru
          _
        // Predicated region
        $region25: #{tpu_custom_call.1} parent=19 // pred_check
          %p221 = pneg %p86
        $region26: #{tpu_custom_call.1} parent=19 // pred_check_branch
          %223 = sbr.rel (%p221) target = $region28
        $region27: #{tpu_custom_call.1} parent=19 // pred_region
          %s224 = sand.u32 %s20, 1
          %s225 = scalar_lea.sflag [#allocation8], %s224
          %s226 = sand.u32 %s76, 1
          %s227 = smul.addr %s226, 32
          %s228 = scalar_lea.vmem [#allocation7], %s227
          %s229 = smul.u32 %s27, 2
          %s230 = sadd.s32 %s229, %s28
          %s231 = smul.u32 2, %s230
          %233 = vsyncadd %s225, 0
          %s234 = smul.addr %s231, 2
          %s235 = smul.addr %s234, 8
          %s236 = scalar_lea.hbm %s1, %s235
          %s237 = sshll.u32 %s236, 4
          %s238 = int_to_ptr.hbm [resolvable:$true] %s237
          %s239 = sshll.u32 %s228, 4
          %s240 = int_to_ptr.vmem [resolvable:$true] %s239
          %245 = dma.hbm_to_vmem [thread:$0]  %s238, 512, %s240, %s225, 256, 256, 16
        $region28: #{tpu_custom_call.1} parent=19 // pred_fallthru
          _
      $region20: #{tpu_custom_call.1} parent=5 // pred_fallthru
        _
      %p246 = scmp.le.s32.totalorder 1, %s20
      %p247 = scmp.lt.s32.totalorder %s20, 5
      %p248 = pnand %p246, %p247
      %p249 = pneg %p248
      // Predicated region
      $region29: #{tpu_custom_call.1} parent=5 // pred_check
        _
      $region30: #{tpu_custom_call.1} parent=5 // pred_check_branch
        %251 = sbr.rel (%p248) target = $region32
      $region31: #{tpu_custom_call.1} parent=5 // pred_region
        %s252 = ssub.s32 %s20, 1
        %s253 = sand.u32 %s49, 1
        %s254 = scalar_lea.sflag [#allocation5], %s253
        %s255 = sand.u32 %s49, 1
        %s256 = smul.addr %s255, 32
        %s257 = scalar_lea.vmem [#allocation4], %s256
        // Predicated region
        $region33: #{tpu_custom_call.1} parent=31 // pred_check
          %p258 = pneg %p62
        $region34: #{tpu_custom_call.1} parent=31 // pred_check_branch
          %260 = sbr.rel (%p258) target = $region36
        $region35: #{tpu_custom_call.1} parent=31 // pred_region
          %262 = dma.done %s254, 512
        $region36: #{tpu_custom_call.1} parent=31 // pred_fallthru
          _
        %s263 = sand.u32 %s25, 1
        %s264 = scalar_lea.sflag [#allocation8], %s263
        %s265 = sand.u32 %s79, 1
        %s266 = smul.addr %s265, 32
        %s267 = scalar_lea.vmem [#allocation7], %s266
        // Predicated region
        $region37: #{tpu_custom_call.1} parent=31 // pred_check
          %p268 = pneg %p92
        $region38: #{tpu_custom_call.1} parent=31 // pred_check_branch
          %270 = sbr.rel (%p268) target = $region40
        $region39: #{tpu_custom_call.1} parent=31 // pred_region
          %272 = dma.done %s264, 512
        $region40: #{tpu_custom_call.1} parent=31 // pred_fallthru
          _
        // Predicated region
        $region41: #{tpu_custom_call.1} parent=31 // pred_check
          %p273 = pneg %p113
        $region42: #{tpu_custom_call.1} parent=31 // pred_check_branch
          %275 = sbr.rel (%p273) target = $region44
        $region43: #{tpu_custom_call.1} parent=31 // pred_region
          %277 = dma.done [#allocation8], 32
        $region44: #{tpu_custom_call.1} parent=31 // pred_fallthru
          _
        %s278 = sand.u32 %s49, 1
        %s279 = scalar_lea.sflag [#allocation5], %s278
        %s280 = sand.u32 %s49, 1
        %s281 = smul.addr %s280, 32
        %s282 = scalar_lea.vmem [#allocation4], %s281
        %p283 = pneg %p62
        %p284 = pneg %p59
        %s285 = sand.u32 %s25, 1
        %s286 = scalar_lea.sflag [#allocation8], %s285
        %s287 = sand.u32 %s79, 1
        %s288 = smul.addr %s287, 32
        %s289 = scalar_lea.vmem [#allocation7], %s288
        %p290 = pneg %p92
        %p291 = pneg %p89
        %p292 = pneg %p113
        %p293 = pneg %p110
        %p294 = pneg %p139
        %p295 = pneg %p136
        %p296 = scmp.lt.s32.totalorder %s29, 1
        %s297 = scalar_select %p296, %s29, 1
        %s298 = scalar_lea.vmem %s3, %s297
        %p299 = pneg %p165
        %p300 = pneg %p162
        %s301 = sand.u32 %s152, 1
        %s302 = scalar_lea.sflag [#allocation6], %s301
        %s303 = sand.u32 %s152, 1
        %s304 = smul.addr %s303, 2
        %s305 = scalar_lea.vmem [#allocation10], %s304
        %s306 = smul.u32 %s29, 2
        %s307 = sadd.s32 %s306, %s30
        %s308 = smul.u32 2, %s307
        %s309 = smul.u32 %s29, 2
        %s310 = sadd.s32 %s309, %s30
        %s311 = smul.u32 2, %s310
        %p312 = scmp.lt.s32.totalorder %s29, 1
        %s313 = scalar_select %p312, %s29, 1
        %s314 = scalar_lea.vmem %s3, %s313
        %p315 = scmp.eq.s32.totalorder %s30, 0
        // Predicated region
        $region45: #{tpu_custom_call.1} parent=31 // pred_check
          %p316 = pneg %p315
        $region46: #{tpu_custom_call.1} parent=31 // pred_check_branch
          %318 = sbr.rel (%p316) target = $region48
        $region47: #{tpu_custom_call.1} parent=31 // pred_region
          %vm319 = vcmask 0
          %320 = vst.msk [vmem:[#allocation2] sm:$0x1] %vm319, 0.0
          %v321 = vlaneseq
          %vm322 = vcmp.ge.s32.totalorder %v321, 0
          %vm323 = vcmp.lt.s32.totalorder %v321, 256
          %vm324 = vmand %vm322, %vm323
          %325 = vst.msk [vmem:[#allocation3] sm:$0x3] %vm324, 0.0
        $region48: #{tpu_custom_call.1} parent=31 // pred_fallthru
          _
        %v326 = vld [vmem:[%s257] sm:$0xff]
        %v327 = vld [vmem:[%s257 + $0x8] sm:$0xff]
        %v328 = vld [vmem:[%s257 + $0x10] sm:$0xff]
        %v329 = vld [vmem:[%s257 + $0x18] sm:$0xff]
        %v330 = vmul.f32 %v326, 10.0
        %v331 = vmul.f32 %v327, 10.0
        %v332 = vmul.f32 %v328, 10.0
        %v333 = vmul.f32 %v329, 10.0
        %v334 = vld [vmem:[%s267] sm:$0xff]
        %v335 = vld [vmem:[%s267 + $0x8] sm:$0xff]
        %v336 = vld [vmem:[%s267 + $0x10] sm:$0xff]
        %v337 = vld [vmem:[%s267 + $0x18] sm:$0xff]
        %v338 = vmul.f32 %v334, 25.0
        %v339 = vmul.f32 %v335, 25.0
        %v340 = vmul.f32 %v336, 25.0
        %v341 = vmul.f32 %v337, 25.0
        %v342 = vld [vmem:[#allocation9] sm:$0x3]
        %v344 = vperm.slane %v342, 0
        %v345 = vperm.slane %v342, 1
        %v348 = vsub.f32 %v338, %v344
        %v349 = vsub.f32 %v339, %v345
        %v350 = vsub.f32 %v340, %v344
        %v351 = vsub.f32 %v341, %v345
        %v352 = vmax.f32 %v348, %v349
        %353 = vmax.xlane.f32.xlu0 %v352
        %v354 = vpop.xlane.xlu0 %353
        %v355 = vmax.f32 %v350, %v351
        %356 = vmax.xlane.f32.xlu0 %v355
        %v357 = vpop.xlane.xlu0 %356
        %v358 = vsub.f32 %v348, %v354
        %v359 = vsub.f32 %v349, %v354
        %v360 = vsub.f32 %v350, %v357
        %v361 = vsub.f32 %v351, %v357
        %v362 = vmul.f32 %v358, 1.442695
        %v363 = vpow.pop %v362
        %v364 = vmul.f32 %v359, 1.442695
        %v365 = vpow.pop %v364
        %v366 = vmul.f32 %v360, 1.442695
        %v367 = vpow.pop %v366
        %v368 = vmul.f32 %v361, 1.442695
        %v369 = vpow.pop %v368
        %v370 = vadd.f32 %v363, %v365
        %371 = vadd.xlane.f32.xlu0 %v370
        %v372 = vpop.xlane.xlu0 %371
        %v373 = vadd.f32 %v367, %v369
        %374 = vadd.xlane.f32.xlu0 %v373
        %v375 = vpop.xlane.xlu0 %374
        %v376 = vrcp.pop %v372
        %v377 = vmul.f32 %v372, %v376
        %v378 = vsub.f32 1.0, %v377
        %v379 = vmul.f32 %v376, %v378
        %v380 = vadd.f32 %v376, %v379
        %vm381 = vweird.f32 %v372
        %vm382 = vweird.f32 %v376
        %vm383 = vmor %vm381, %vm382
        %v384 = vsel %vm383, %v376, %v380
        %v385 = vand.u32 2147483647, %v372
        %vm386 = vcmp.eq.f32.partialorder %v385, 8.507059e+37
        %v387 = vand.u32 %v372, 2147483648
        %v388 = vor.u32 1.1754944e-38, %v387
        %v389 = vsel %vm386, %v388, %v384
        %v390 = vrcp.pop %v375
        %v391 = vmul.f32 %v375, %v390
        %v392 = vsub.f32 1.0, %v391
        %v393 = vmul.f32 %v390, %v392
        %v394 = vadd.f32 %v390, %v393
        %vm395 = vweird.f32 %v375
        %vm396 = vweird.f32 %v390
        %vm397 = vmor %vm395, %vm396
        %v398 = vsel %vm397, %v390, %v394
        %v399 = vand.u32 2147483647, %v375
        %vm400 = vcmp.eq.f32.partialorder %v399, 8.507059e+37
        %v401 = vand.u32 %v375, 2147483648
        %v402 = vor.u32 1.1754944e-38, %v401
        %v403 = vsel %vm400, %v402, %v398
        %v404 = vmul.f32 %v363, %v389
        %v405 = vmul.f32 %v365, %v389
        %v406 = vmul.f32 %v367, %v403
        %v407 = vmul.f32 %v369, %v403
        %v408 = vadd.f32 %v404, 1e-05
        %v409 = vadd.f32 %v405, 1e-05
        %v410 = vadd.f32 %v406, 1e-05
        %v411 = vadd.f32 %v407, 1e-05
        %v412 = vmax.f32 %v330, %v331
        %413 = vmax.xlane.f32.xlu0 %v412
        %v414 = vpop.xlane.xlu0 %413
        %v415 = vmax.f32 %v332, %v333
        %416 = vmax.xlane.f32.xlu0 %v415
        %v417 = vpop.xlane.xlu0 %416
        %v418 = vsub.f32 %v330, %v414
        %v419 = vsub.f32 %v331, %v414
        %v420 = vsub.f32 %v332, %v417
        %v421 = vsub.f32 %v333, %v417
        %v422 = vmul.f32 %v418, 1.442695
        %v423 = vpow.pop %v422
        %v424 = vmul.f32 %v419, 1.442695
        %v425 = vpow.pop %v424
        %v426 = vmul.f32 %v420, 1.442695
        %v427 = vpow.pop %v426
        %v428 = vmul.f32 %v421, 1.442695
        %v429 = vpow.pop %v428
        %v430 = vadd.f32 %v423, %v425
        %431 = vadd.xlane.f32.xlu0 %v430
        %v432 = vpop.xlane.xlu0 %431
        %v433 = vadd.f32 %v427, %v429
        %434 = vadd.xlane.f32.xlu0 %v433
        %v435 = vpop.xlane.xlu0 %434
        %v436 = vlog2.pop %v432
        %v437 = vmul.f32 %v436, 0.6931472
        %v438 = vlog2.pop %v435
        %v439 = vmul.f32 %v438, 0.6931472
        %v440 = vmul.f32 %v408, %v418
        %v441 = vmul.f32 %v409, %v419
        %v442 = vmul.f32 %v410, %v420
        %v443 = vmul.f32 %v411, %v421
        %v444 = vadd.f32 %v440, %v441
        %445 = vadd.xlane.f32.xlu0 %v444
        %v446 = vpop.xlane.xlu0 %445
        %v447 = vadd.f32 %v442, %v443
        %448 = vadd.xlane.f32.xlu0 %v447
        %v449 = vpop.xlane.xlu0 %448
        %v450 = vmul.f32 %v437, 1.00256
        %v451 = vmul.f32 %v439, 1.00256
        %v452 = vsub.f32 %v450, %v446
        %v453 = vsub.f32 %v451, %v449
        %v454 = vld [vmem:[#allocation2] sm:$0x1]
        %v455 = vadd.f32 %v452, %v453
        %v456 = vrot.slane %v455, 4
        %v457 = vadd.f32 %v455, %v456
        %v458 = vrot.slane %v457, 2
        %v459 = vadd.f32 %v457, %v458
        %v460 = vrot.slane %v459, 1
        %v461 = vadd.f32 %v459, %v460
        %v462 = vadd.f32 %v454, %v461
        %vm463 = vcmask 0
        %464 = vst.msk [vmem:[#allocation2] sm:$0x1] %vm463, %v462
        %v465 = vld [vmem:[#allocation3] sm:$0x3]
        %v466 = vadd.f32 %v408, %v410
        %v467 = vrot.slane %v466, 4
        %v468 = vadd.f32 %v466, %v467
        %v469 = vrot.slane %v468, 2
        %v470 = vadd.f32 %v468, %v469
        %v471 = vrot.slane %v470, 1
        %v472 = vadd.f32 %v470, %v471
        %v473 = vadd.f32 %v409, %v411
        %v474 = vrot.slane %v473, 4
        %v475 = vadd.f32 %v473, %v474
        %v476 = vrot.slane %v475, 2
        %v477 = vadd.f32 %v475, %v476
        %v478 = vrot.slane %v477, 1
        %v479 = vadd.f32 %v477, %v478
        %v482 = vrot.slane %v479, 7
        %vm483 = vcmask 1040384
        %v484 = vsel %vm483, %v472, %v482
        %v486 = vadd.f32 %v465, %v484
        %v487 = vlaneseq
        %vm488 = vcmp.ge.s32.totalorder %v487, 0
        %vm489 = vcmp.lt.s32.totalorder %v487, 256
        %vm490 = vmand %vm488, %vm489
        %491 = vst.msk [vmem:[#allocation3] sm:$0x3] %vm490, %v486
        %p492 = scmp.eq.s32.totalorder %s30, 1
        // Predicated region
        $region49: #{tpu_custom_call.1} parent=31 // pred_check
          %p493 = pneg %p492
        $region50: #{tpu_custom_call.1} parent=31 // pred_check_branch
          %495 = sbr.rel (%p493) target = $region52
        $region51: #{tpu_custom_call.1} parent=31 // pred_region
          %v496 = vld [vmem:[#allocation2] sm:$0x1]
          %497 = vst.msk [vmem:[%s314] sm:$0x1] %vm463, %v496
          %v498 = vld [vmem:[#allocation3] sm:$0x3]
          %499 = vst.msk [vmem:[%s305] sm:$0x3] %vm490, %v498
        $region52: #{tpu_custom_call.1} parent=31 // pred_fallthru
          _
        %p500 = scmp.lt.s32.totalorder %s29, 1
        %s501 = scalar_select %p500, %s29, 1
        %s502 = scalar_lea.vmem %s3, %s501
        %s503 = sand.u32 %s152, 1
        %s504 = scalar_lea.sflag [#allocation6], %s503
        %s505 = sand.u32 %s152, 1
        %s506 = smul.addr %s505, 2
        %s507 = scalar_lea.vmem [#allocation10], %s506
        // Predicated region
        $region53: #{tpu_custom_call.1} parent=31 // pred_check
          %p508 = pneg %p136
        $region54: #{tpu_custom_call.1} parent=31 // pred_check_branch
          %510 = sbr.rel (%p508) target = $region56
        $region55: #{tpu_custom_call.1} parent=31 // pred_region
          _
        $region56: #{tpu_custom_call.1} parent=31 // pred_fallthru
          _
        // Predicated region
        $region57: #{tpu_custom_call.1} parent=31 // pred_check
          %p511 = pneg %p162
        $region58: #{tpu_custom_call.1} parent=31 // pred_check_branch
          %513 = sbr.rel (%p511) target = $region60
        $region59: #{tpu_custom_call.1} parent=31 // pred_region
          %515 = vsyncadd %s504, 0
          %s516 = smul.addr %s29, 2
          %s517 = scalar_lea.hbm %s4, %s516
          %s519 = sshll.u32 %s507, 4
          %s520 = int_to_ptr.vmem [resolvable:$true] %s519
          %s521 = sshll.u32 %s517, 4
          %s522 = int_to_ptr.hbm [resolvable:$true] %s521
          %524 = dma.vmem_to_hbm [thread:$0]  %s520, 32, %s522, %s504
        $region60: #{tpu_custom_call.1} parent=31 // pred_fallthru
          _
      $region32: #{tpu_custom_call.1} parent=5 // pred_fallthru
        _
      %p525 = scmp.le.s32.totalorder 2, %s20
      // Predicated region
      $region61: #{tpu_custom_call.1} parent=5 // pred_check
        %p526 = pneg %p525
      $region62: #{tpu_custom_call.1} parent=5 // pred_check_branch
        %528 = sbr.rel (%p526) target = $region64
      $region63: #{tpu_custom_call.1} parent=5 // pred_region
        %s529 = ssub.s32 %s20, 2
        // Predicated region
        $region65: #{tpu_custom_call.1} parent=63 // pred_check
          %p530 = pneg %p142
        $region66: #{tpu_custom_call.1} parent=63 // pred_check_branch
          %532 = sbr.rel (%p530) target = $region68
        $region67: #{tpu_custom_call.1} parent=63 // pred_region
          %p533 = scmp.lt.s32.totalorder %s31, 1
          %s534 = scalar_select %p533, %s31, 1
          %s535 = scalar_lea.vmem %s3, %s534
        $region68: #{tpu_custom_call.1} parent=63 // pred_fallthru
          _
        // Predicated region
        $region69: #{tpu_custom_call.1} parent=63 // pred_check
          %p536 = pneg %p168
        $region70: #{tpu_custom_call.1} parent=63 // pred_check_branch
          %538 = sbr.rel (%p536) target = $region72
        $region71: #{tpu_custom_call.1} parent=63 // pred_region
          %s539 = sand.u32 %s153, 1
          %s540 = scalar_lea.sflag [#allocation6], %s539
          %s541 = sand.u32 %s153, 1
          %s542 = smul.addr %s541, 2
          %s543 = scalar_lea.vmem [#allocation10], %s542
          %545 = dma.done %s540, 32
        $region72: #{tpu_custom_call.1} parent=63 // pred_fallthru
          _
      $region64: #{tpu_custom_call.1} parent=5 // pred_fallthru
        _
    $region6: #{tpu_custom_call.1} parent=1 // loop_footer
      %s24 = sadd.s32 1, %s20
    $region7: #{tpu_custom_call.1} parent=1 // loop_footer_branch
      %19 = sbr.rel target = $region3
    $region8: #{tpu_custom_call.1} parent=1 // loop_exit
      _
    %546 = vsyncpa [#allocation5], 1
    %s547 = scalar_lea.sflag [#allocation5], 1
    %548 = vsyncpa %s547, 1
    %549 = vsyncpa [#allocation8], 1
    %s550 = scalar_lea.sflag [#allocation8], 1
    %551 = vsyncpa %s550, 1
    %552 = vsyncpa [#allocation6], 1
    %s553 = scalar_lea.sflag [#allocation6], 1
    %554 = vsyncpa %s553, 1

</llo_original>
